<compile_context>
chip_gen: v7x
topology: tpu7x:2x2x1
jax: 0.10.0
libtpu: 0.0.40
codegen_flags: <defaults>
</compile_context>

<pallas_src>
import math
import functools

import jax
import jax.numpy as jnp
from jax.experimental import pallas as pl
from jax.experimental.pallas import tpu as pltpu


# ---------------------------------------------------------------------------
# Kernels.  Each grid step handles a contiguous, lane-dense [TS, TB*D] slab of
# the flattened x / out.  The [TS, D] PE tile is re-used for every batch slice
# with static lane slices -- no jnp.tile, no materialized [TS, TB*D] PE copy.
# ---------------------------------------------------------------------------
def _pe_dropout_prng_kernel(seed_ref, x_ref, pe_ref, o_ref, *, tb, d,
                            threshold, scale):
    """Train path on TPU: in-kernel hardware PRNG, integer-threshold dropout."""
    # Fold both grid coordinates into the seed for per-tile stream separation.
    pltpu.prng_seed(seed_ref[0], pl.program_id(0), pl.program_id(1))
    pe = pe_ref[...]                                              # [TS, D]
    for b in range(tb):                                           # static unroll
        lo = b * d
        y = x_ref[:, lo:lo + d] + pe                              # [TS, D]
        # Per-batch-slice bits: 1/TB the footprint of a full-tile mask.
        bits = pltpu.bitcast(pltpu.prng_random_bits(y.shape), jnp.uint32)
        keep = bits >= jnp.uint32(threshold)                      # P(drop) = p
        o_ref[:, lo:lo + d] = jnp.where(keep, y * scale, 0.0).astype(o_ref.dtype)


def _pe_dropout_bits_kernel(x_ref, pe_ref, bits_ref, o_ref, *, tb, d,
                            threshold, scale):
    """Train path off-TPU (interpret/CPU): dropout bits streamed from HBM."""
    pe = pe_ref[...]
    for b in range(tb):
        lo = b * d
        y = x_ref[:, lo:lo + d] + pe
        keep = bits_ref[:, lo:lo + d] >= jnp.uint32(threshold)
        o_ref[:, lo:lo + d] = jnp.where(keep, y * scale, 0.0).astype(o_ref.dtype)


# ---------------------------------------------------------------------------
# Generation-aware sizing helpers
# ---------------------------------------------------------------------------
def _vmem_budget():
    """(scoped VMEM limit, per-tile byte budget) sized for the current chip."""
    try:
        cap = int(pltpu.get_tpu_info().vmem_capacity_bytes)
    except Exception:
        cap = 64 * 1024 * 1024                 # conservative (v7x-sized) default
    limit = max(16 * 2**20, min(96 * 2**20, (cap * 3) // 4))
    # x + out tiles are double-buffered (4 live tiles) + PE tile + headroom.
    tile_bytes = max(1 * 2**20, limit // 8)
    return limit, tile_bytes


def _dimension_semantics():
    """Shard the independent grid across TensorCores where the chip has >1."""
    # TODO(synk): verify in an xprof trace that both v7x TCs pick up grid steps.
    try:
        info = pltpu.get_tpu_info()
        for name in ("num_cores_per_chip", "tensor_cores_per_chip",
                     "cores_per_chip"):
            cores = getattr(info, name, None)
            if cores is not None and int(cores) > 1:
                return (pltpu.CORE_PARALLEL, pltpu.ARBITRARY)
    except Exception:
        pass
    return (pltpu.PARALLEL, pltpu.ARBITRARY)


def _choose_tiling(S, B, D, itemsize, tile_bytes):
    """Pick (TS rows, TB batches-per-tile).  TS aligned to packed sublanes."""
    sub = 32 // itemsize                       # 8 (f32) / 16 (bf16) / 32 (i8)
    min_rows = S if S < sub else sub

    def ts_for(tb):
        rows = tile_bytes // max(1, tb * D * itemsize)
        if rows >= S:
            return S
        return max(sub, (rows // sub) * sub)

    # Preferred: whole batch in one lane-dense tile (full-extent last dim).
    if B * D * itemsize * min_rows <= tile_bytes:
        return ts_for(B), B

    # Row too wide for even a minimal-height tile: split the batch along a
    # second grid axis.  Non-full-extent column blocks must be 128-lane aligned.
    for tb in sorted((t for t in range(1, B) if B % t == 0), reverse=True):
        if (tb * D) % 128 == 0 and tb * D * itemsize * min_rows <= tile_bytes:
            return ts_for(tb), tb

    # TODO(synk): could additionally split D; fall back to the smallest legal
    # full-batch tile (may exceed the soft per-tile budget).
    return min_rows, B


# ---------------------------------------------------------------------------
# Wrapper
# ---------------------------------------------------------------------------
def positional_encoding_forward(x, pe_table, *, p=0.1, train=True, seed=0):
    """x: [S, B, D], pe_table: [max_len, D], seed: python int / int32 scalar."""
    S, B, D = x.shape
    if not (0.0 <= p < 1.0):
        raise ValueError(f"dropout p must be in [0, 1), got {p}")

    dtype = x.dtype
    # Pre-cast PE to the activation dtype (halves PE DMA/VMEM for bf16).
    # NOTE: diverges from torch type promotion (bf16 x + f32 buffer -> f32 out).
    pe = pe_table[:S, :].astype(dtype)                            # [S, D]

    apply_dropout = bool(train) and p > 0.0
    if not apply_dropout:
        # Eval: a bare broadcasted add -- leave it to XLA so it fuses with
        # producer/consumer ops instead of forcing an extra HBM round trip.
        return x + pe[:, None, :]

    itemsize = dtype.itemsize
    BD = B * D
    x2 = x.reshape(S, BD)                                         # free reshape

    vmem_limit, tile_bytes = _vmem_budget()
    TS, TB = _choose_tiling(S, B, D, itemsize, tile_bytes)
    cols = TB * D
    grid = (pl.cdiv(S, TS), B // TB)

    threshold = min(int(round(p * (1 << 32))), (1 << 32) - 1)     # P(drop)=p
    scale = 1.0 / (1.0 - p)

    out_shape = jax.ShapeDtypeStruct((S, BD), dtype)
    compiler_params = pltpu.CompilerParams(
        dimension_semantics=_dimension_semantics(),
        vmem_limit_bytes=vmem_limit)
    cost = pl.CostEstimate(flops=3 * S * BD, transcendentals=0,
                           bytes_accessed=(2 * S * BD + S * D) * itemsize)

    if jax.default_backend() == "tpu":
        # TODO(synk): dropout RNG stream differs from torch's PRNG; inverted-
        # dropout semantics (keep prob 1-p, scale 1/(1-p)) match.
        seed_arr = jnp.asarray([seed], dtype=jnp.int32)
        out2 = pl.pallas_call(
            functools.partial(_pe_dropout_prng_kernel, tb=TB, d=D,
                              threshold=threshold, scale=scale),
            out_shape=out_shape,
            grid_spec=pltpu.PrefetchScalarGridSpec(
                num_scalar_prefetch=1,
                grid=grid,
                in_specs=[pl.BlockSpec((TS, cols), lambda i, j, s: (i, j)),
                          pl.BlockSpec((TS, D), lambda i, j, s: (i, 0))],
                out_specs=pl.BlockSpec((TS, cols), lambda i, j, s: (i, j))),
            compiler_params=compiler_params,
            cost_estimate=cost,
        )(seed_arr, x2, pe)
    else:
        # CPU / interpret fallback: pltpu PRNG primitives have no CPU lowering,
        # so the dropout bits are generated host-side and streamed in.
        bits = jax.random.bits(jax.random.PRNGKey(int(seed)), (S, BD),
                               dtype=jnp.uint32)
        out2 = pl.pallas_call(
            functools.partial(_pe_dropout_bits_kernel, tb=TB, d=D,
                              threshold=threshold, scale=scale),
            out_shape=out_shape,
            grid_spec=pltpu.PrefetchScalarGridSpec(
                num_scalar_prefetch=0,
                grid=grid,
                in_specs=[pl.BlockSpec((TS, cols), lambda i, j: (i, j)),
                          pl.BlockSpec((TS, D), lambda i, j: (i, 0)),
                          pl.BlockSpec((TS, cols), lambda i, j: (i, j))],
                out_specs=pl.BlockSpec((TS, cols), lambda i, j: (i, j))),
            compiler_params=compiler_params,
            cost_estimate=cost,
        )(x2, pe, bits)

    return out2.reshape(S, B, D)


# ---------------------------------------------------------------------------
# PE table construction (matches the PyTorch __init__ exactly)
# ---------------------------------------------------------------------------
def make_pe_table(max_len, d_model, dtype=jnp.float32):
    position = jnp.arange(max_len, dtype=jnp.float32)[:, None]          # [L, 1]
    div_term = jnp.exp(
        jnp.arange(0, d_model, 2, dtype=jnp.float32)
        * (-math.log(10000.0) / d_model))                               # [D/2]
    ang = position * div_term                                           # [L, D/2]
    pe = jnp.zeros((max_len, d_model), dtype)
    pe = pe.at[:, 0::2].set(jnp.sin(ang))
    pe = pe.at[:, 1::2].set(jnp.cos(ang))
    return pe                                                           # [L, D]


# ---------------------------------------------------------------------------
# Demo / smoke test
# ---------------------------------------------------------------------------
if __name__ == "__main__":
    S, B, D = 8, 2, 32
    MAX_LEN = 64
    P_DROP = 0.1

    key = jax.random.PRNGKey(0)
    x = jax.random.normal(key, (S, B, D), dtype=jnp.float32)
    pe_table = make_pe_table(MAX_LEN, D)
    ref = x + pe_table[:S][:, None, :]

    # Eval mode (dropout = identity): exact check against pure-JAX reference.
    out_eval = positional_encoding_forward(x, pe_table, p=P_DROP, train=False,
                                           seed=1234)
    out_eval = jax.block_until_ready(out_eval)
    assert out_eval.shape == (S, B, D)
    assert jnp.allclose(out_eval, ref, atol=1e-6, rtol=1e-6)

    # Training mode (Pallas kernel): every output element must be either 0
    # (dropped) or (x + pe) / (1 - p) (kept, inverted-dropout scaling).
    out_train = positional_encoding_forward(x, pe_table, p=P_DROP, train=True,
                                            seed=1234)
    out_train = jax.block_until_ready(out_train)
    assert out_train.shape == (S, B, D)
    assert out_train.dtype == x.dtype
    kept_val = ref / (1.0 - P_DROP)
    ok = (out_train == 0) | jnp.isclose(out_train, kept_val,
                                        atol=1e-5, rtol=1e-5)
    assert bool(jnp.all(ok))
    assert bool(jnp.any(out_train != 0))

    print("KERNEL_OK")
</pallas_src>

<mosaic_0001>
module attributes {stable_mosaic.version = 11 : i64} {
  func.func @_pe_dropout_bits_kernel(%arg0: i32, %arg1: i32, %arg2: memref<8x64xf32, #tpu.memory_space<vmem>>, %arg3: memref<8x32xf32, #tpu.memory_space<vmem>>, %arg4: memref<8x64xi32, #tpu.memory_space<vmem>>, %arg5: memref<8x64xf32, #tpu.memory_space<vmem>>) attributes {dimension_semantics = [#tpu.dimension_semantics<parallel>, #tpu.dimension_semantics<arbitrary>], iteration_bounds = array<i64: 1, 1>, scalar_prefetch = 0 : i64, scratch_operands = 0 : i64, tpu.core_type = #tpu.core_type<tc>, window_params = [{transform_indices = @transform_0, window_bounds = array<i64: 8, 64>}, {transform_indices = @transform_1, window_bounds = array<i64: 8, 32>}, {transform_indices = @transform_2, window_bounds = array<i64: 8, 64>}, {transform_indices = @transform_3, window_bounds = array<i64: 8, 64>}]} {
    %c0 = arith.constant 0 : index
    %c0_0 = arith.constant 0 : index
    %0 = vector.load %arg3[%c0, %c0_0] : memref<8x32xf32, #tpu.memory_space<vmem>>, vector<8x32xf32>
    %c0_1 = arith.constant 0 : index
    %c0_2 = arith.constant 0 : index
    %1 = vector.load %arg2[%c0_1, %c0_2] : memref<8x64xf32, #tpu.memory_space<vmem>>, vector<8x32xf32>
    %2 = arith.addf %1, %0 : vector<8x32xf32>
    %c0_3 = arith.constant 0 : index
    %c0_4 = arith.constant 0 : index
    %3 = vector.load %arg4[%c0_3, %c0_4] : memref<8x64xi32, #tpu.memory_space<vmem>>, vector<8x32xi32>
    %c429496730_i32 = arith.constant 429496730 : i32
    %4 = vector.broadcast %c429496730_i32 : i32 to vector<8x32xi32>
    %5 = arith.cmpi uge, %3, %4 : vector<8x32xi32>
    %cst = arith.constant 1.11111116 : f32
    %6 = vector.broadcast %cst : f32 to vector<8x32xf32>
    %7 = arith.mulf %2, %6 : vector<8x32xf32>
    %cst_5 = arith.constant 0.000000e+00 : f32
    %8 = vector.broadcast %cst_5 : f32 to vector<8x32xf32>
    %9 = arith.select %5, %7, %8 : vector<8x32xi1>, vector<8x32xf32>
    %c0_6 = arith.constant 0 : index
    %c0_7 = arith.constant 0 : index
    %10 = vector.load %arg5[%c0_6, %c0_7] : memref<8x64xf32, #tpu.memory_space<vmem>>, vector<8x32xf32>
    tpu.vector_store %arg5[%c0_6, %c0_7], %9 {strides = array<i32>} : memref<8x64xf32, #tpu.memory_space<vmem>>, vector<8x32xf32>,
    %c0_8 = arith.constant 0 : index
    %c32 = arith.constant 32 : index
    %11 = vector.load %arg2[%c0_8, %c32] : memref<8x64xf32, #tpu.memory_space<vmem>>, vector<8x32xf32>
    %12 = arith.addf %11, %0 : vector<8x32xf32>
    %c0_9 = arith.constant 0 : index
    %c32_10 = arith.constant 32 : index
    %13 = vector.load %arg4[%c0_9, %c32_10] : memref<8x64xi32, #tpu.memory_space<vmem>>, vector<8x32xi32>
    %c429496730_i32_11 = arith.constant 429496730 : i32
    %14 = vector.broadcast %c429496730_i32_11 : i32 to vector<8x32xi32>
    %15 = arith.cmpi uge, %13, %14 : vector<8x32xi32>
    %cst_12 = arith.constant 1.11111116 : f32
    %16 = vector.broadcast %cst_12 : f32 to vector<8x32xf32>
    %17 = arith.mulf %12, %16 : vector<8x32xf32>
    %cst_13 = arith.constant 0.000000e+00 : f32
    %18 = vector.broadcast %cst_13 : f32 to vector<8x32xf32>
    %19 = arith.select %15, %17, %18 : vector<8x32xi1>, vector<8x32xf32>
    %c0_14 = arith.constant 0 : index
    %c32_15 = arith.constant 32 : index
    %20 = vector.load %arg5[%c0_14, %c32_15] : memref<8x64xf32, #tpu.memory_space<vmem>>, vector<8x32xf32>
    tpu.vector_store %arg5[%c0_14, %c32_15], %19 {strides = array<i32>} : memref<8x64xf32, #tpu.memory_space<vmem>>, vector<8x32xf32>,
    return
  }
  func.func @transform_0(%arg0: i32, %arg1: i32) -> (i32, i32) {
    %c0_i32 = arith.constant 0 : i32
    return %arg0, %arg1 : i32, i32
  }
  func.func @transform_1(%arg0: i32, %arg1: i32) -> (i32, i32) {
    %c0_i32 = arith.constant 0 : i32
    %c0_i32_0 = arith.constant 0 : i32
    return %arg0, %c0_i32 : i32, i32
  }
  func.func @transform_2(%arg0: i32, %arg1: i32) -> (i32, i32) {
    %c0_i32 = arith.constant 0 : i32
    return %arg0, %arg1 : i32, i32
  }
  func.func @transform_3(%arg0: i32, %arg1: i32) -> (i32, i32) {
    %c0_i32 = arith.constant 0 : i32
    return %arg0, %arg1 : i32, i32
  }
}

</mosaic_0001>

<llo_original>
// kernel: tpu_custom_call.1
$region0: #{tpu_custom_call.1}
  #allocation0 [shape = 'u32[]', space=smem, size = 0x4, offset = 0x4, fixed_abs, tag = 'smem constant byte address 0x4 - core index']
  #allocation1 [shape = 'u32[144,128]{1,0:T(1,128)}', space=vmem, size = 0x12000, scoped, tag = 'internal scratch']
  %s0 = inlined_call_operand.hbm [shape: f32[8,64], index: 0, kind: input, shape index: {}]
  %s1 = inlined_call_operand.hbm [shape: f32[8,32], index: 1, kind: input, shape index: {}]
  %s2 = inlined_call_operand.hbm [shape: u32[8,64], index: 2, kind: input, shape index: {}]
  %s3 = inlined_call_operand.hbm [shape: f32[8,64], index: 3, kind: output, shape index: {}]
  %s4 = sld [smem:[#allocation0]]
  $region34: #{tpu_custom_call.1} parent=0
    _
  %s6 = ssub.s32 1, %s4
  %s7 = scalar_select 0, %s6, %s4
  $region1: #{tpu_custom_call.1} parent=0
    #allocation2 [shape = 'u8[4096]{0}', space=vmem, size = 0x1000, scoped, tag = 'input window, operand 0, single buffered']
    #allocation3 [shape = 's32[1]{0}', space=sflag, size = 0x4, scoped, tag = 'scoped memory for tpu_custom_call.1']
    #allocation4 [shape = 's32[1]{0}', space=sflag, size = 0x4, scoped, tag = 'scoped memory for tpu_custom_call.1']
    #allocation5 [shape = 'u8[4096]{0}', space=vmem, size = 0x1000, scoped, tag = 'input window, operand 1, single buffered']
    #allocation6 [shape = 's32[1]{0}', space=sflag, size = 0x4, scoped, tag = 'scoped memory for tpu_custom_call.1']
    #allocation7 [shape = 'u8[4096]{0}', space=vmem, size = 0x1000, scoped, tag = 'input window, operand 2, single buffered']
    #allocation8 [shape = 'u8[4096]{0}', space=vmem, size = 0x1000, scoped, tag = 'output window, operand 0, single buffered']
    %8 = vsyncpa [#allocation3], 0
    %9 = vsyncpa [#allocation6], 0
    %10 = vsyncpa [#allocation4], 0
    // Predicated region
    $region2: #{tpu_custom_call.1} parent=1 // pred_check
      _
    $region3: #{tpu_custom_call.1} parent=1 // pred_check_branch
      %12 = sbr.rel (0) target = $region5
    $region4: #{tpu_custom_call.1} parent=1 // pred_region
      %s14 = ssub.s32 128, 128
      %15 = vsyncadd [#allocation3], %s14
      %s17 = sshll.u32 [#allocation2], 4
      %s18 = int_to_ptr.vmem [resolvable:$true] %s17
      %20 = dma.hbm_to_vmem [thread:$0]  %s0, 128, %s18, [#allocation3]
    $region5: #{tpu_custom_call.1} parent=1 // pred_fallthru
      _
    // Predicated region
    $region6: #{tpu_custom_call.1} parent=1 // pred_check
      _
    $region7: #{tpu_custom_call.1} parent=1 // pred_check_branch
      %22 = sbr.rel (0) target = $region9
    $region8: #{tpu_custom_call.1} parent=1 // pred_region
      %s24 = ssub.s32 128, 128
      %25 = vsyncadd [#allocation6], %s24
      %s27 = sshll.u32 [#allocation5], 4
      %s28 = int_to_ptr.vmem [resolvable:$true] %s27
      %30 = dma.hbm_to_vmem [thread:$0]  %s1, 128, %s28, [#allocation6]
    $region9: #{tpu_custom_call.1} parent=1 // pred_fallthru
      _
    // Predicated region
    $region10: #{tpu_custom_call.1} parent=1 // pred_check
      _
    $region11: #{tpu_custom_call.1} parent=1 // pred_check_branch
      %32 = sbr.rel (0) target = $region13
    $region12: #{tpu_custom_call.1} parent=1 // pred_region
      %s34 = ssub.s32 128, 128
      %35 = vsyncadd [#allocation6], %s34
      %s37 = sshll.u32 [#allocation7], 4
      %s38 = int_to_ptr.vmem [resolvable:$true] %s37
      %40 = dma.hbm_to_vmem [thread:$0]  %s2, 128, %s38, [#allocation6]
    $region13: #{tpu_custom_call.1} parent=1 // pred_fallthru
      _
    // Predicated region
    $region14: #{tpu_custom_call.1} parent=1 // pred_check
      _
    $region15: #{tpu_custom_call.1} parent=1 // pred_check_branch
      %42 = sbr.rel (0) target = $region17
    $region16: #{tpu_custom_call.1} parent=1 // pred_region
      %43 = dma.done [#allocation3], 128
    $region17: #{tpu_custom_call.1} parent=1 // pred_fallthru
      _
    // Predicated region
    $region18: #{tpu_custom_call.1} parent=1 // pred_check
      _
    $region19: #{tpu_custom_call.1} parent=1 // pred_check_branch
      %45 = sbr.rel (0) target = $region21
    $region20: #{tpu_custom_call.1} parent=1 // pred_region
      %46 = dma.done [#allocation6], 128
    $region21: #{tpu_custom_call.1} parent=1 // pred_fallthru
      _
    // Predicated region
    $region22: #{tpu_custom_call.1} parent=1 // pred_check
      _
    $region23: #{tpu_custom_call.1} parent=1 // pred_check_branch
      %48 = sbr.rel (0) target = $region25
    $region24: #{tpu_custom_call.1} parent=1 // pred_region
      %49 = dma.done [#allocation6], 128
    $region25: #{tpu_custom_call.1} parent=1 // pred_fallthru
      _
    %v50 = vld [vmem:[#allocation5] sm:$0xff]
    %v51 = vld [vmem:[#allocation2] sm:$0xff]
    %v52 = vadd.f32 %v51, %v50
    %v53 = vld [vmem:[#allocation7] sm:$0xff]
    %vm54 = vcmp.ge.u32.totalorder %v53, 429496730
    %v55 = vmul.f32 %v52, 1.1111112
    %v56 = vsel %vm54, %v55, 0.0
    %vm57 = vcmask 261120
    %58 = vst.msk [vmem:[#allocation8] sm:$0xff] %vm57, %v56
    %v59 = vld [vmem:[#allocation2] sm:$0xff]
    %61 = vrot.lane.b32.xlu0 %v50, 32
    %v62 = vpop.permute.xlu0 %61
    %v64 = vadd.f32 %v59, %v62
    %v65 = vld [vmem:[#allocation7] sm:$0xff]
    %vm66 = vcmp.ge.u32.totalorder %v65, 429496730
    %v67 = vmul.f32 %v64, 1.1111112
    %v68 = vsel %vm66, %v67, 0.0
    %vm69 = vcmask 523520
    %70 = vst.msk [vmem:[#allocation8] sm:$0xff] %vm69, %v68
    // Predicated region
    $region26: #{tpu_custom_call.1} parent=1 // pred_check
      _
    $region27: #{tpu_custom_call.1} parent=1 // pred_check_branch
      %72 = sbr.rel (0) target = $region29
    $region28: #{tpu_custom_call.1} parent=1 // pred_region
      %s74 = ssub.s32 128, 128
      %75 = vsyncadd [#allocation4], %s74
      %s77 = sshll.u32 [#allocation8], 4
      %s78 = int_to_ptr.vmem [resolvable:$true] %s77
      %80 = dma.vmem_to_hbm [thread:$0]  %s78, 128, %s3, [#allocation4]
    $region29: #{tpu_custom_call.1} parent=1 // pred_fallthru
      _
    // Predicated region
    $region30: #{tpu_custom_call.1} parent=1 // pred_check
      _
    $region31: #{tpu_custom_call.1} parent=1 // pred_check_branch
      %82 = sbr.rel (0) target = $region33
    $region32: #{tpu_custom_call.1} parent=1 // pred_region
      %83 = dma.done [#allocation4], 128
    $region33: #{tpu_custom_call.1} parent=1 // pred_fallthru
      _
    %84 = vsyncpa [#allocation3], 1
    %85 = vsyncpa [#allocation6], 1
    %86 = vsyncpa [#allocation4], 1

</llo_original>
